<compile_context>
chip_gen: v7x
topology: tpu7x:2x2x1
jax: 0.10.0
libtpu: 0.0.40
codegen_flags: <defaults>
</compile_context>

<pallas_src>
import jax
import jax.numpy as jnp
from jax.experimental import pallas as pl
from jax.experimental.pallas import tpu as pltpu

GAMMA = 2.0   # module default; statically 2 -> implemented as a square
EPS = 1e-7


def _round_up(x, m):
    return (x + m - 1) // m * m


def focal_loss_kernel(preds_ref, labels_ref, weight_ref, out_ref):
    # Native-dtype load, f32 math inside VMEM.
    x = preds_ref[...].astype(jnp.float32)          # (TN, C) logits
    lab = labels_ref[...]                           # (TN, 1) int32 labels
    w = weight_ref[...].astype(jnp.float32)         # (1,  C) class weights

    # Numerically-stable softmax pieces.  Only the target-class probability is
    # ever needed (the one-hot mask zeroes every other column), so the divide,
    # log, focal factor and weight are all per-row scalars.
    m = jnp.max(x, axis=1, keepdims=True)
    e = jnp.exp(x - m)                              # one EUP exp per element
    s = jnp.sum(e, axis=1, keepdims=True)

    # one_hot(labels) via lane-iota comparison.  Out-of-range labels (e.g. -1)
    # give an all-zero row, matching the reference one_hot; garbage rows of a
    # ragged last block are never stored.
    col = jax.lax.broadcasted_iota(jnp.int32, x.shape, dimension=1)
    target = (col == lab).astype(jnp.float32)       # (TN, C)

    e_t = jnp.sum(e * target, axis=1, keepdims=True)   # (TN, 1) exp at target col
    w_t = jnp.sum(w * target, axis=1, keepdims=True)   # (TN, 1) weight at target col
    p_t = e_t / s                                       # target-class softmax prob
    ce = -jnp.log(p_t + EPS)                            # TN logs, not TN*C
    q = 1.0 - p_t
    row_scale = (q * q) * ce * w_t                      # gamma == 2 -> VPU square

    # Dense (N, C) output for reduction='none' parity (one nonzero per row).
    out_ref[...] = (target * row_scale).astype(out_ref.dtype)


def _choose_tile_n(N, C, in_bytes, out_bytes, row_align):
    """Row-tile size from an explicit VMEM byte budget (incl. label padding)."""
    # Per-row VMEM footprint, double-buffered streams:
    #   logits-in + loss-out blocks, plus the (tile_n, 1) int32 label block,
    #   which is lane-padded to (tile_n, 128) in VMEM.
    per_row = 2 * C * (in_bytes + out_bytes) + 2 * 128 * 4
    budget = 20 * 1024 * 1024          # headroom under the 32 MiB limit set below
    cap = max(row_align, (budget // per_row) // row_align * row_align)
    # diminishing returns past a few MiB per block; keep input blocks <= ~4 MiB
    cap_blk = max(row_align,
                  ((4 * 1024 * 1024) // max(1, C * in_bytes))
                  // row_align * row_align)
    tile_n = min(cap, cap_blk)
    if tile_n >= N:
        if N >= 2048:
            # big enough to be worth sharding over v7x's two TensorCores
            tile_n = _round_up(-(-N // 2), row_align)
            if tile_n >= N:
                tile_n = N
        else:
            tile_n = N                 # single full-extent block
    return tile_n


def focal_loss(preds, labels, weight, *, out_dtype=None):
    """preds: (N, C) logits, labels: (N,) int, weight: (C,) -> (N, C) focal loss."""
    N, C = preds.shape
    out_dtype = preds.dtype if out_dtype is None else jnp.dtype(out_dtype)

    in_bytes = jnp.dtype(preds.dtype).itemsize
    out_bytes = jnp.dtype(out_dtype).itemsize
    # sublane packing: 4-byte tiles are (8,128) rows, 2-byte (16,128), 1-byte (32,128)
    row_align = {4: 8, 2: 16, 1: 32}.get(in_bytes, 8)

    tile_n = _choose_tile_n(N, C, in_bytes, out_bytes, row_align)
    grid = (pl.cdiv(N, tile_n),)   # ragged last block: stores masked by Pallas

    lab = labels.astype(jnp.int32).reshape(N, 1)
    w = weight.reshape(1, C)

    cost = pl.CostEstimate(
        flops=8 * N * C,
        transcendentals=N * C + 2 * N,
        bytes_accessed=(in_bytes + out_bytes) * N * C + 4 * N
                       + jnp.dtype(weight.dtype).itemsize * C,
    )

    return pl.pallas_call(
        focal_loss_kernel,
        out_shape=jax.ShapeDtypeStruct((N, C), out_dtype),
        grid_spec=pltpu.PrefetchScalarGridSpec(
            num_scalar_prefetch=0,
            grid=grid,
            in_specs=[
                pl.BlockSpec((tile_n, C), lambda i: (i, 0)),
                pl.BlockSpec((tile_n, 1), lambda i: (i, 0)),
                pl.BlockSpec((1, C), lambda i: (0, 0)),
            ],
            out_specs=pl.BlockSpec((tile_n, C), lambda i: (i, 0)),
        ),
        compiler_params=pltpu.CompilerParams(
            dimension_semantics=("parallel",),
            vmem_limit_bytes=32 * 1024 * 1024,
        ),
        cost_estimate=cost,
    )(preds, lab, w)
    # TODO(synk): reduction='mean'/'sum' and non-integer gamma are not needed for
    # the module defaults; apply jnp.mean/jnp.sum on the result if required.


def focal_loss_ref(preds, labels, weight):
    p = jax.nn.softmax(preds, axis=1)
    target = jax.nn.one_hot(labels, preds.shape[1], dtype=preds.dtype)
    ce = -jnp.log(p + EPS) * target
    floss = jnp.power(1.0 - p, GAMMA) * ce
    return floss * weight.reshape(1, -1)


if __name__ == "__main__":
    key = jax.random.PRNGKey(0)
    k1, k2, k3 = jax.random.split(key, 3)

    N, C = 8, 32                                   # batch=8, num_classes=32
    preds = jax.random.normal(k1, (N, C), dtype=jnp.float32)
    labels = jax.random.randint(k2, (N,), 0, C, dtype=jnp.int32)
    # deterministic synthetic per-class weights (module stores self.weight)
    weight = jax.random.uniform(k3, (C,), dtype=jnp.float32, minval=0.5,
                                maxval=1.5)

    out = focal_loss(preds, labels, weight)
    jax.block_until_ready(out)

    ref = focal_loss_ref(preds, labels, weight)
    assert out.shape == (N, C)
    assert out.dtype == preds.dtype
    assert jnp.allclose(out, ref, atol=1e-5, rtol=1e-5)

    print("KERNEL_OK")
</pallas_src>

<mosaic_0001>
module attributes {stable_mosaic.version = 11 : i64} {
  func.func @focal_loss_kernel(%arg0: i32, %arg1: memref<8x32xf32, #tpu.memory_space<vmem>>, %arg2: memref<8x1xi32, #tpu.memory_space<vmem>>, %arg3: memref<1x32xf32, #tpu.memory_space<vmem>>, %arg4: memref<8x32xf32, #tpu.memory_space<vmem>>) attributes {dimension_semantics = [#tpu.dimension_semantics<parallel>], iteration_bounds = array<i64: 1>, scalar_prefetch = 0 : i64, scratch_operands = 0 : i64, tpu.core_type = #tpu.core_type<tc>, window_params = [{transform_indices = @transform_0, window_bounds = array<i64: 8, 32>}, {transform_indices = @transform_1, window_bounds = array<i64: 8, 1>}, {pipeline_mode = #tpu.pipeline_mode<synchronous>, transform_indices = @transform_2, window_bounds = array<i64: 1, 32>}, {transform_indices = @transform_3, window_bounds = array<i64: 8, 32>}]} {
    %c0 = arith.constant 0 : index
    %c0_0 = arith.constant 0 : index
    %0 = vector.load %arg1[%c0, %c0_0] : memref<8x32xf32, #tpu.memory_space<vmem>>, vector<8x32xf32>
    %c0_1 = arith.constant 0 : index
    %c0_2 = arith.constant 0 : index
    %1 = vector.load %arg2[%c0_1, %c0_2] : memref<8x1xi32, #tpu.memory_space<vmem>>, vector<8x1xi32>
    %c0_3 = arith.constant 0 : index
    %c0_4 = arith.constant 0 : index
    %2 = vector.load %arg3[%c0_3, %c0_4] : memref<1x32xf32, #tpu.memory_space<vmem>>, vector<1x32xf32>
    %cst = arith.constant dense<0xFF800000> : vector<8xf32>
    %3 = vector.multi_reduction <maximumf>, %0, %cst [1] : vector<8x32xf32> to vector<8xf32>
    %4 = vector.shape_cast %3 : vector<8xf32> to vector<8x1xf32>
    %5 = vector.broadcast %4 : vector<8x1xf32> to vector<8x32xf32>
    %6 = arith.subf %0, %5 : vector<8x32xf32>
    %7 = math.exp %6 : vector<8x32xf32>
    %cst_5 = arith.constant dense<0.000000e+00> : vector<8xf32>
    %8 = vector.multi_reduction <add>, %7, %cst_5 [1] : vector<8x32xf32> to vector<8xf32>
    %9 = vector.shape_cast %8 : vector<8xf32> to vector<8x1xf32>
    %10 = tpu.iota {dimensions = array<i32: 1>} : vector<8x32xi32>
    %11 = vector.broadcast %1 : vector<8x1xi32> to vector<8x32xi32>
    %12 = arith.cmpi eq, %10, %11 : vector<8x32xi32>
    %13 = arith.extui %12 : vector<8x32xi1> to vector<8x32xi32>
    %14 = arith.sitofp %13 : vector<8x32xi32> to vector<8x32xf32>
    %15 = arith.mulf %7, %14 : vector<8x32xf32>
    %cst_6 = arith.constant dense<0.000000e+00> : vector<8xf32>
    %16 = vector.multi_reduction <add>, %15, %cst_6 [1] : vector<8x32xf32> to vector<8xf32>
    %17 = vector.shape_cast %16 : vector<8xf32> to vector<8x1xf32>
    %18 = vector.broadcast %2 : vector<1x32xf32> to vector<8x32xf32>
    %19 = arith.mulf %18, %14 : vector<8x32xf32>
    %cst_7 = arith.constant dense<0.000000e+00> : vector<8xf32>
    %20 = vector.multi_reduction <add>, %19, %cst_7 [1] : vector<8x32xf32> to vector<8xf32>
    %21 = vector.shape_cast %20 : vector<8xf32> to vector<8x1xf32>
    %22 = arith.divf %17, %9 : vector<8x1xf32>
    %cst_8 = arith.constant 1.000000e-07 : f32
    %23 = vector.broadcast %cst_8 : f32 to vector<8x1xf32>
    %24 = arith.addf %22, %23 : vector<8x1xf32>
    %25 = math.log %24 : vector<8x1xf32>
    %cst_9 = arith.constant 0.000000e+00 : f32
    %26 = vector.broadcast %cst_9 : f32 to vector<8x1xf32>
    %27 = arith.subf %26, %25 : vector<8x1xf32>
    %cst_10 = arith.constant 1.000000e+00 : f32
    %28 = vector.broadcast %cst_10 : f32 to vector<8x1xf32>
    %29 = arith.subf %28, %22 : vector<8x1xf32>
    %30 = arith.mulf %29, %29 : vector<8x1xf32>
    %31 = arith.mulf %30, %27 : vector<8x1xf32>
    %32 = arith.mulf %31, %21 : vector<8x1xf32>
    %33 = vector.broadcast %32 : vector<8x1xf32> to vector<8x32xf32>
    %34 = arith.mulf %14, %33 : vector<8x32xf32>
    %c0_11 = arith.constant 0 : index
    %c0_12 = arith.constant 0 : index
    %35 = vector.load %arg4[%c0_11, %c0_12] : memref<8x32xf32, #tpu.memory_space<vmem>>, vector<8x32xf32>
    tpu.vector_store %arg4[%c0_11, %c0_12], %34 {strides = array<i32>} : memref<8x32xf32, #tpu.memory_space<vmem>>, vector<8x32xf32>,
    return
  }
  func.func @transform_0(%arg0: i32) -> (i32, i32) {
    %c0_i32 = arith.constant 0 : i32
    %c0_i32_0 = arith.constant 0 : i32
    return %arg0, %c0_i32 : i32, i32
  }
  func.func @transform_1(%arg0: i32) -> (i32, i32) {
    %c0_i32 = arith.constant 0 : i32
    %c0_i32_0 = arith.constant 0 : i32
    return %arg0, %c0_i32 : i32, i32
  }
  func.func @transform_2(%arg0: i32) -> (i32, i32) {
    %c0_i32 = arith.constant 0 : i32
    %c0_i32_0 = arith.constant 0 : i32
    %c0_i32_1 = arith.constant 0 : i32
    return %c0_i32, %c0_i32_0 : i32, i32
  }
  func.func @transform_3(%arg0: i32) -> (i32, i32) {
    %c0_i32 = arith.constant 0 : i32
    %c0_i32_0 = arith.constant 0 : i32
    return %arg0, %c0_i32 : i32, i32
  }
}

</mosaic_0001>

<llo_original>
// kernel: tpu_custom_call.1
$region0: #{tpu_custom_call.1}
  #allocation0 [shape = 'u32[]', space=smem, size = 0x4, offset = 0x4, fixed_abs, tag = 'smem constant byte address 0x4 - core index']
  #allocation1 [shape = 'u32[144,128]{1,0:T(1,128)}', space=vmem, size = 0x12000, scoped, tag = 'internal scratch']
  %s0 = inlined_call_operand.vmem [shape: f32[8,32], index: 0, kind: input, shape index: {}]
  %s1 = inlined_call_operand.vmem [shape: s32[8,1], index: 1, kind: input, shape index: {}]
  %s2 = inlined_call_operand.vmem [shape: f32[1,32], index: 2, kind: input, shape index: {}]
  %s3 = inlined_call_operand.hbm [shape: f32[8,32], index: 3, kind: output, shape index: {}]
  %s4 = sld [smem:[#allocation0]]
  $region22: #{tpu_custom_call.1} parent=0
    _
  %s6 = ssub.s32 1, %s4
  %s7 = scalar_select 0, %s6, %s4
  $region1: #{tpu_custom_call.1} parent=0
    #allocation2 [shape = 'u8[4096]{0}', space=vmem, size = 0x1000, scoped, tag = 'output window, operand 0, single buffered']
    #allocation3 [shape = 's32[1]{0}', space=sflag, size = 0x4, scoped, tag = 'scoped memory for tpu_custom_call.1']
    %8 = vsyncpa [#allocation3], 0
    // Predicated region
    $region2: #{tpu_custom_call.1} parent=1 // pred_check
      _
    $region3: #{tpu_custom_call.1} parent=1 // pred_check_branch
      %10 = sbr.rel (0) target = $region5
    $region4: #{tpu_custom_call.1} parent=1 // pred_region
      _
    $region5: #{tpu_custom_call.1} parent=1 // pred_fallthru
      _
    // Predicated region
    $region6: #{tpu_custom_call.1} parent=1 // pred_check
      _
    $region7: #{tpu_custom_call.1} parent=1 // pred_check_branch
      %12 = sbr.rel (0) target = $region9
    $region8: #{tpu_custom_call.1} parent=1 // pred_region
      _
    $region9: #{tpu_custom_call.1} parent=1 // pred_fallthru
      _
    // Predicated region
    $region10: #{tpu_custom_call.1} parent=1 // pred_check
      _
    $region11: #{tpu_custom_call.1} parent=1 // pred_check_branch
      %14 = sbr.rel (0) target = $region13
    $region12: #{tpu_custom_call.1} parent=1 // pred_region
      _
    $region13: #{tpu_custom_call.1} parent=1 // pred_fallthru
      _
    %v15 = vld [vmem:[%s0] sm:$0xff]
    %v16 = vld [vmem:[%s1] sm:$0xff]
    %v17 = vld [vmem:[%s2] sm:$0x1]
    %vm18 = vcmask 261120
    %v19 = vsel %vm18, %v15, -inf
    %20 = vmax.xlane.f32.xlu0 %v19
    %v21 = vpop.xlane.xlu0 %20
    %v22 = vsub.f32 %v15, %v21
    %v23 = vmul.f32 %v22, 1.442695
    %v24 = vpow.pop %v23
    %v25 = vsel %vm18, %v24, 0.0
    %26 = vadd.xlane.f32.xlu0 %v25
    %v27 = vpop.xlane.xlu0 %26
    %v28 = vlaneseq
    %v29 = vand.u32 %v28, 127
    %30 = vset.pattern.permute.xlu0 0
    %31 = vperm.xlu0 %30, %v16
    %v32 = vpop.permute.xlu0 %31
    %vm33 = vcmp.eq.s32.totalorder %v29, %v32
    %v34 = vsel %vm33, 1, 0
    %v35 = vcvt.s32.f32 %v34
    %v36 = vmul.f32 %v24, %v35
    %v37 = vsel %vm18, %v36, 0.0
    %38 = vadd.xlane.f32.xlu0 %v37
    %v39 = vpop.xlane.xlu0 %38
    %v41 = vlaneseq
    %v42 = vshrl.u32 %v41, 7
    %v43 = vsub.s32 0, %v42
    %v44 = vrot.slane %v17, %v43
    %v46 = vmul.f32 %v44, %v35
    %v47 = vsel %vm18, %v46, 0.0
    %48 = vadd.xlane.f32.xlu0 %v47
    %v49 = vpop.xlane.xlu0 %48
    %v50 = vrcp.pop %v27
    %v51 = vmul.f32 %v39, %v50
    %v52 = vadd.f32 %v51, 1e-07
    %v53 = vlog2.pop %v52
    %v54 = vmul.f32 %v53, 0.6931472
    %v55 = vsub.f32 0.0, %v54
    %v56 = vsub.f32 1.0, %v51
    %v57 = vmul.f32 %v56, %v56
    %v58 = vmul.f32 %v57, %v55
    %v59 = vmul.f32 %v58, %v49
    %v60 = vmul.f32 %v35, %v59
    %61 = vst.msk [vmem:[#allocation2] sm:$0xff] %vm18, %v60
    // Predicated region
    $region14: #{tpu_custom_call.1} parent=1 // pred_check
      _
    $region15: #{tpu_custom_call.1} parent=1 // pred_check_branch
      %63 = sbr.rel (0) target = $region17
    $region16: #{tpu_custom_call.1} parent=1 // pred_region
      %s65 = ssub.s32 128, 128
      %66 = vsyncadd [#allocation3], %s65
      %s68 = sshll.u32 [#allocation2], 4
      %s69 = int_to_ptr.vmem [resolvable:$true] %s68
      %71 = dma.vmem_to_hbm [thread:$0]  %s69, 128, %s3, [#allocation3]
    $region17: #{tpu_custom_call.1} parent=1 // pred_fallthru
      _
    // Predicated region
    $region18: #{tpu_custom_call.1} parent=1 // pred_check
      _
    $region19: #{tpu_custom_call.1} parent=1 // pred_check_branch
      %73 = sbr.rel (0) target = $region21
    $region20: #{tpu_custom_call.1} parent=1 // pred_region
      %74 = dma.done [#allocation3], 128
    $region21: #{tpu_custom_call.1} parent=1 // pred_fallthru
      _
    %75 = vsyncpa [#allocation3], 1

</llo_original>
